<compile_context>
chip_gen: v5e
topology: v5e:2x2
jax: 0.10.0
libtpu: 0.0.40
codegen_flags: <defaults>
</compile_context>

<pallas_src>
import jax
import jax.numpy as jnp
from jax import lax
from jax.experimental import pallas as pl
from jax.experimental.pallas import tpu as pltpu

_BN_EPS = 1e-5
_M_TILE = 512   # rows of im2col patches per grid step


def _round_up(x, m):
    return (x + m - 1) // m * m


# ----------------------------------------------------------------------------
# Pallas kernels
# ----------------------------------------------------------------------------
def _matmul_stats_kernel(p_ref, w_ref, y_ref, stats_ref):
    # [TM, Kp] bf16 @ [Kp, Cp] bf16 -> f32 on the MXU
    y = jnp.dot(p_ref[...], w_ref[...], preferred_element_type=jnp.float32)
    y_ref[...] = y
    # per-tile per-channel partial sums for the (full-batch) BN statistics
    s = jnp.sum(y, axis=0, keepdims=True)        # [1, Cp]
    ss = jnp.sum(y * y, axis=0, keepdims=True)   # [1, Cp]
    row = lax.broadcasted_iota(jnp.int32, stats_ref.shape, 0)
    stats_ref[...] = jnp.where(row == 0, s, jnp.where(row == 1, ss, 0.0))


def _affine_kernel(y_ref, a_ref, b_ref, o_ref):
    # BatchNorm finalize: out = a*y + b (a, b per output channel)
    o_ref[...] = y_ref[...] * a_ref[...] + b_ref[...]


# ----------------------------------------------------------------------------
# Plain-JAX glue: im2col for 3x3 conv, stride=1, padding=1 (built in [M, K])
# ----------------------------------------------------------------------------
def _im2col_s1_p1_k3(x_nchw):
    N, Cin, H, W = x_nchw.shape
    x = jnp.transpose(x_nchw, (0, 2, 3, 1)).astype(jnp.bfloat16)     # NHWC
    xp = jnp.pad(x, ((0, 0), (1, 1), (1, 1), (0, 0)))
    cols = [xp[:, kh:kh + H, kw:kw + W, :]
            for kh in range(3) for kw in range(3)]                   # 9 x [N,H,W,Cin]
    patches = jnp.concatenate(cols, axis=-1)                         # [N,H,W,9*Cin]
    return patches.reshape(N * H * W, 9 * Cin), (N, H, W)


# ----------------------------------------------------------------------------
# Fused conv (im2col matmul) + per-channel scale (folded) + training-mode BN
# ----------------------------------------------------------------------------
@jax.jit
def _conv_bn(x, weights, channel_scale, gamma, beta):
    Cout = weights.shape[0]
    N, _, H, W = x.shape
    patches, _ = _im2col_s1_p1_k3(x)
    M, K = patches.shape

    # weight matrix with K in (kh, kw, cin) order; fold per-channel scale
    w_mat = jnp.transpose(weights, (2, 3, 1, 0)).reshape(K, Cout)
    w_mat = w_mat * channel_scale.reshape(1, Cout)

    # pad to MXU / lane friendly sizes
    Kp = _round_up(K, 128)
    Cp = _round_up(Cout, 128)
    TM = min(_M_TILE, _round_up(M, 8))
    Mp = _round_up(M, TM)
    n_tiles = Mp // TM

    patches_p = jnp.pad(patches, ((0, Mp - M), (0, Kp - K)))          # bf16
    w_p = jnp.pad(w_mat, ((0, Kp - K), (0, Cp - Cout))).astype(jnp.bfloat16)

    # ---- pass 1: tiled matmul + per-tile BN partial sums -------------------
    y, stats = pl.pallas_call(
        _matmul_stats_kernel,
        out_shape=(jax.ShapeDtypeStruct((Mp, Cp), jnp.float32),
                   jax.ShapeDtypeStruct((n_tiles * 8, Cp), jnp.float32)),
        grid=(n_tiles,),
        in_specs=[pl.BlockSpec((TM, Kp), lambda i: (i, 0)),
                  pl.BlockSpec((Kp, Cp), lambda i: (0, 0))],
        out_specs=(pl.BlockSpec((TM, Cp), lambda i: (i, 0)),
                   pl.BlockSpec((8, Cp), lambda i: (i, 0))),
        compiler_params=pltpu.CompilerParams(
            dimension_semantics=("parallel",)),
    )(patches_p, w_p)

    # ---- tiny glue: full-batch BN statistics from the partials -------------
    # (padded rows are exactly zero, so dividing by the true M is exact)
    st = stats.reshape(n_tiles, 8, Cp)
    total = jnp.sum(st[:, 0, :], axis=0)
    total_sq = jnp.sum(st[:, 1, :], axis=0)
    mean = total / M
    var = jnp.maximum(total_sq / M - mean * mean, 0.0)   # biased (training) var
    gamma_p = jnp.pad(gamma.astype(jnp.float32), (0, Cp - Cout))
    beta_p = jnp.pad(beta.astype(jnp.float32), (0, Cp - Cout))
    a_vec = gamma_p * lax.rsqrt(var + _BN_EPS)
    b_vec = beta_p - a_vec * mean
    a = a_vec.reshape(1, Cp)
    b = b_vec.reshape(1, Cp)

    # ---- pass 2: apply out = a*y + b ----------------------------------------
    out = pl.pallas_call(
        _affine_kernel,
        out_shape=jax.ShapeDtypeStruct((Mp, Cp), jnp.float32),
        grid=(n_tiles,),
        in_specs=[pl.BlockSpec((TM, Cp), lambda i: (i, 0)),
                  pl.BlockSpec((1, Cp), lambda i: (0, 0)),
                  pl.BlockSpec((1, Cp), lambda i: (0, 0))],
        out_specs=pl.BlockSpec((TM, Cp), lambda i: (i, 0)),
        compiler_params=pltpu.CompilerParams(
            dimension_semantics=("parallel",)),
    )(y, a, b)

    out = out[:M, :Cout].reshape(N, H, W, Cout).transpose(0, 3, 1, 2)
    return out


# ----------------------------------------------------------------------------
# Module
# ----------------------------------------------------------------------------
class Convolution9:
    """JAX/Pallas port of the PyTorch Convolution9 module (training-mode BN)."""

    def __init__(self, in_features, out_features, key):
        self.in_features = in_features
        self.out_features = out_features
        # kaiming_normal_, mode='fan_out', nonlinearity='relu':
        #   std = sqrt(2 / (out_features * 3 * 3))
        std = (2.0 / (out_features * 9)) ** 0.5
        self.weights = std * jax.random.normal(
            key, (out_features, in_features, 3, 3), jnp.float32)
        # BatchNorm2d affine params (default init: gamma=1, beta=0)
        self.bn_gamma = jnp.ones((out_features,), jnp.float32)
        self.bn_beta = jnp.zeros((out_features,), jnp.float32)
        # TODO(synk): BatchNorm running-statistics updates (a training-mode
        # side effect) are not tracked; forward outputs do not depend on them.

    def forward(self, inputs, sel, pr, i, pattern):
        Cout = self.out_features
        if pattern == 0:
            ones = jnp.ones((Cout,), jnp.float32)
            return _conv_bn(inputs, self.weights, ones,
                            self.bn_gamma, self.bn_beta)
        elif i == 0:
            # weight statistics (adaptive avg pools over the parameters):
            # tiny parameter-side glue, kept in plain JAX (not the hot path).
            w = self.weights
            sel_avg = jnp.sum(jnp.mean(w, axis=(2, 3)), axis=1).reshape(1, Cout)
            pr_avg = jnp.mean(w, axis=(1, 2, 3)).reshape(1, Cout)
            return sel_avg, pr_avg
        elif i == 1:
            # pr scales the weights per output channel; sel scales the conv
            # output per channel.  Conv is linear, so both fold exactly into
            # one per-output-channel scale on the weight columns.
            scale = pr.reshape(Cout) * sel.reshape(Cout)
            return _conv_bn(inputs, self.weights, scale,
                            self.bn_gamma, self.bn_beta)


# ----------------------------------------------------------------------------
# Reference (plain JAX, literal translation of the PyTorch forward)
# ----------------------------------------------------------------------------
def _reference_conv_bn(x, weights, pr, sel, gamma, beta):
    Cout = weights.shape[0]
    w = weights * pr.reshape(Cout, 1, 1, 1)
    y = lax.conv_general_dilated(
        x, w, window_strides=(1, 1), padding=((1, 1), (1, 1)),
        dimension_numbers=("NCHW", "OIHW", "NCHW"))
    y = y * sel.reshape(1, Cout, 1, 1)
    mean = jnp.mean(y, axis=(0, 2, 3), keepdims=True)
    var = jnp.mean(jnp.square(y - mean), axis=(0, 2, 3), keepdims=True)
    return (gamma.reshape(1, Cout, 1, 1) * (y - mean) * lax.rsqrt(var + _BN_EPS)
            + beta.reshape(1, Cout, 1, 1))


# ----------------------------------------------------------------------------
# Demo
# ----------------------------------------------------------------------------
if __name__ == "__main__":
    N, Cin, Cout, H, W = 2, 4, 8, 16, 16

    root = jax.random.PRNGKey(0)
    k_w, k_x, k_sel, k_pr = jax.random.split(root, 4)

    module = Convolution9(Cin, Cout, k_w)
    x = jax.random.normal(k_x, (N, Cin, H, W), jnp.float32)
    sel = jax.random.uniform(k_sel, (1, Cout), jnp.float32)
    pr = jax.random.uniform(k_pr, (1, Cout), jnp.float32)

    # pattern == 0 branch: conv + BN
    out0 = module.forward(x, sel, pr, i=1, pattern=0)
    # i == 0 branch: weight statistics
    sel_avg, pr_avg = module.forward(x, sel, pr, i=0, pattern=1)
    # i == 1 branch: pr/sel scaled conv + BN
    out1 = module.forward(x, sel, pr, i=1, pattern=1)

    jax.block_until_ready((out0, sel_avg, pr_avg, out1))

    assert out0.shape == (N, Cout, H, W)
    assert out1.shape == (N, Cout, H, W)
    assert sel_avg.shape == (1, Cout) and pr_avg.shape == (1, Cout)

    # correctness vs. the plain-JAX reference (bf16 matmul -> loose tolerance)
    ones = jnp.ones((1, Cout), jnp.float32)
    ref0 = _reference_conv_bn(x, module.weights, ones, ones,
                              module.bn_gamma, module.bn_beta)
    ref1 = _reference_conv_bn(x, module.weights, pr, sel,
                              module.bn_gamma, module.bn_beta)
    assert float(jnp.max(jnp.abs(out0 - ref0))) < 0.1
    assert float(jnp.max(jnp.abs(out1 - ref1))) < 0.1

    print("KERNEL_OK")
</pallas_src>

<mosaic_0001>
module attributes {stable_mosaic.version = 11 : i64} {
  func.func @_matmul_stats_kernel(%arg0: i32, %arg1: memref<512x128xbf16, #tpu.memory_space<vmem>>, %arg2: memref<128x128xbf16, #tpu.memory_space<vmem>>, %arg3: memref<512x128xf32, #tpu.memory_space<vmem>>, %arg4: memref<8x128xf32, #tpu.memory_space<vmem>>) attributes {dimension_semantics = [#tpu.dimension_semantics<parallel>], iteration_bounds = array<i64: 1>, scalar_prefetch = 0 : i64, scratch_operands = 0 : i64, tpu.core_type = #tpu.core_type<tc>, window_params = [{transform_indices = @transform_0, window_bounds = array<i64: 512, 128>}, {pipeline_mode = #tpu.pipeline_mode<synchronous>, transform_indices = @transform_1, window_bounds = array<i64: 128, 128>}, {transform_indices = @transform_2, window_bounds = array<i64: 512, 128>}, {transform_indices = @transform_3, window_bounds = array<i64: 8, 128>}]} {
    %c0 = arith.constant 0 : index
    %c0_0 = arith.constant 0 : index
    %0 = vector.load %arg1[%c0, %c0_0] : memref<512x128xbf16, #tpu.memory_space<vmem>>, vector<512x128xbf16>
    %c0_1 = arith.constant 0 : index
    %c0_2 = arith.constant 0 : index
    %1 = vector.load %arg2[%c0_1, %c0_2] : memref<128x128xbf16, #tpu.memory_space<vmem>>, vector<128x128xbf16>
    %cst = arith.constant dense<0.000000e+00> : vector<512x128xf32>
    %2 = tpu.matmul %0, %1, %cst {dimension_numbers = #tpu.dot_dimension_numbers<[1], [0], [0], [1], [0, 0, 1, 1], [], []>} : vector<512x128xbf16>, vector<128x128xbf16>, vector<512x128xf32> -> vector<512x128xf32>
    %c0_3 = arith.constant 0 : index
    %c0_4 = arith.constant 0 : index
    %3 = vector.load %arg3[%c0_3, %c0_4] : memref<512x128xf32, #tpu.memory_space<vmem>>, vector<512x128xf32>
    tpu.vector_store %arg3[%c0_3, %c0_4], %2 {strides = array<i32>} : memref<512x128xf32, #tpu.memory_space<vmem>>, vector<512x128xf32>,
    %cst_5 = arith.constant dense<0.000000e+00> : vector<128xf32>
    %4 = vector.multi_reduction <add>, %2, %cst_5 [0] : vector<512x128xf32> to vector<128xf32>
    %5 = vector.shape_cast %4 : vector<128xf32> to vector<1x128xf32>
    %6 = arith.mulf %2, %2 : vector<512x128xf32>
    %cst_6 = arith.constant dense<0.000000e+00> : vector<128xf32>
    %7 = vector.multi_reduction <add>, %6, %cst_6 [0] : vector<512x128xf32> to vector<128xf32>
    %8 = vector.shape_cast %7 : vector<128xf32> to vector<1x128xf32>
    %9 = tpu.iota {dimensions = array<i32: 0>} : vector<8x128xi32>
    %c0_i32 = arith.constant 0 : i32
    %10 = vector.broadcast %c0_i32 : i32 to vector<8x128xi32>
    %11 = arith.cmpi eq, %9, %10 : vector<8x128xi32>
    %c1_i32 = arith.constant 1 : i32
    %12 = vector.broadcast %c1_i32 : i32 to vector<8x128xi32>
    %13 = arith.cmpi eq, %9, %12 : vector<8x128xi32>
    %cst_7 = arith.constant 0.000000e+00 : f32
    %14 = vector.shape_cast %8 : vector<1x128xf32> to vector<1x128xf32>
    %15 = vector.broadcast %14 : vector<1x128xf32> to vector<8x128xf32>
    %16 = vector.broadcast %cst_7 : f32 to vector<8x128xf32>
    %17 = arith.select %13, %15, %16 : vector<8x128xi1>, vector<8x128xf32>
    %18 = vector.shape_cast %5 : vector<1x128xf32> to vector<1x128xf32>
    %19 = vector.broadcast %18 : vector<1x128xf32> to vector<8x128xf32>
    %20 = arith.select %11, %19, %17 : vector<8x128xi1>, vector<8x128xf32>
    %c0_8 = arith.constant 0 : index
    %c0_9 = arith.constant 0 : index
    %21 = vector.load %arg4[%c0_8, %c0_9] : memref<8x128xf32, #tpu.memory_space<vmem>>, vector<8x128xf32>
    tpu.vector_store %arg4[%c0_8, %c0_9], %20 {strides = array<i32>} : memref<8x128xf32, #tpu.memory_space<vmem>>, vector<8x128xf32>,
    return
  }
  func.func @transform_0(%arg0: i32) -> (i32, i32) {
    %c0_i32 = arith.constant 0 : i32
    %c0_i32_0 = arith.constant 0 : i32
    return %arg0, %c0_i32 : i32, i32
  }
  func.func @transform_1(%arg0: i32) -> (i32, i32) {
    %c0_i32 = arith.constant 0 : i32
    %c0_i32_0 = arith.constant 0 : i32
    %c0_i32_1 = arith.constant 0 : i32
    return %c0_i32, %c0_i32_0 : i32, i32
  }
  func.func @transform_2(%arg0: i32) -> (i32, i32) {
    %c0_i32 = arith.constant 0 : i32
    %c0_i32_0 = arith.constant 0 : i32
    return %arg0, %c0_i32 : i32, i32
  }
  func.func @transform_3(%arg0: i32) -> (i32, i32) {
    %c0_i32 = arith.constant 0 : i32
    %c0_i32_0 = arith.constant 0 : i32
    return %arg0, %c0_i32 : i32, i32
  }
}

module attributes {stable_mosaic.version = 11 : i64} {
  func.func @_affine_kernel(%arg0: i32, %arg1: memref<512x128xf32, #tpu.memory_space<vmem>>, %arg2: memref<1x128xf32, #tpu.memory_space<vmem>>, %arg3: memref<1x128xf32, #tpu.memory_space<vmem>>, %arg4: memref<512x128xf32, #tpu.memory_space<vmem>>) attributes {dimension_semantics = [#tpu.dimension_semantics<parallel>], iteration_bounds = array<i64: 1>, scalar_prefetch = 0 : i64, scratch_operands = 0 : i64, tpu.core_type = #tpu.core_type<tc>, window_params = [{transform_indices = @transform_0, window_bounds = array<i64: 512, 128>}, {pipeline_mode = #tpu.pipeline_mode<synchronous>, transform_indices = @transform_1, window_bounds = array<i64: 1, 128>}, {pipeline_mode = #tpu.pipeline_mode<synchronous>, transform_indices = @transform_2, window_bounds = array<i64: 1, 128>}, {transform_indices = @transform_3, window_bounds = array<i64: 512, 128>}]} {
    %c0 = arith.constant 0 : index
    %c0_0 = arith.constant 0 : index
    %0 = vector.load %arg1[%c0, %c0_0] : memref<512x128xf32, #tpu.memory_space<vmem>>, vector<512x128xf32>
    %c0_1 = arith.constant 0 : index
    %c0_2 = arith.constant 0 : index
    %1 = vector.load %arg2[%c0_1, %c0_2] : memref<1x128xf32, #tpu.memory_space<vmem>>, vector<1x128xf32>
    %2 = vector.broadcast %1 : vector<1x128xf32> to vector<512x128xf32>
    %3 = arith.mulf %0, %2 : vector<512x128xf32>
    %c0_3 = arith.constant 0 : index
    %c0_4 = arith.constant 0 : index
    %4 = vector.load %arg3[%c0_3, %c0_4] : memref<1x128xf32, #tpu.memory_space<vmem>>, vector<1x128xf32>
    %5 = vector.broadcast %4 : vector<1x128xf32> to vector<512x128xf32>
    %6 = arith.addf %3, %5 : vector<512x128xf32>
    %c0_5 = arith.constant 0 : index
    %c0_6 = arith.constant 0 : index
    %7 = vector.load %arg4[%c0_5, %c0_6] : memref<512x128xf32, #tpu.memory_space<vmem>>, vector<512x128xf32>
    tpu.vector_store %arg4[%c0_5, %c0_6], %6 {strides = array<i32>} : memref<512x128xf32, #tpu.memory_space<vmem>>, vector<512x128xf32>,
    return
  }
  func.func @transform_0(%arg0: i32) -> (i32, i32) {
    %c0_i32 = arith.constant 0 : i32
    %c0_i32_0 = arith.constant 0 : i32
    return %arg0, %c0_i32 : i32, i32
  }
  func.func @transform_1(%arg0: i32) -> (i32, i32) {
    %c0_i32 = arith.constant 0 : i32
    %c0_i32_0 = arith.constant 0 : i32
    %c0_i32_1 = arith.constant 0 : i32
    return %c0_i32, %c0_i32_0 : i32, i32
  }
  func.func @transform_2(%arg0: i32) -> (i32, i32) {
    %c0_i32 = arith.constant 0 : i32
    %c0_i32_0 = arith.constant 0 : i32
    %c0_i32_1 = arith.constant 0 : i32
    return %c0_i32, %c0_i32_0 : i32, i32
  }
  func.func @transform_3(%arg0: i32) -> (i32, i32) {
    %c0_i32 = arith.constant 0 : i32
    %c0_i32_0 = arith.constant 0 : i32
    return %arg0, %c0_i32 : i32, i32
  }
}

</mosaic_0001>

<llo_original>
// kernel: _conv_bn.3
$region0: #{_conv_bn.3}
  #allocation0 [shape = 'u32[]', space=smem, size = 0x4, offset = 0x4, fixed_abs, tag = 'smem constant byte address 0x4 - core index']
  #allocation1 [shape = 'u32[72,128]{1,0:T(1,128)}', space=vmem, size = 0x9000, scoped, tag = 'internal scratch']
  %s0 = inlined_call_operand.vmem [shape: f32[512,128], index: 0, kind: input, shape index: {}]
  %s1 = inlined_call_operand.vmem [shape: f32[1,128], index: 1, kind: input, shape index: {}]
  %s2 = inlined_call_operand.vmem [shape: f32[1,128], index: 2, kind: input, shape index: {}]
  %s3 = inlined_call_operand.vmem [shape: f32[512,128], index: 3, kind: output, shape index: {}]
  %s4 = sld [smem:[#allocation0]]
  $region22: #{_conv_bn.3} parent=0
    _
  %s6 = ssub.s32 1, %s4
  %s7 = scalar_select 0, %s6, %s4
  // Predicated region
  $region2: #{_conv_bn.3} parent=0 // pred_check
    _
  $region3: #{_conv_bn.3} parent=0 // pred_check_branch
    %9 = sbr.rel (0) target = $region5
  $region4: #{_conv_bn.3} parent=0 // pred_region
    _
  $region5: #{_conv_bn.3} parent=0 // pred_fallthru
    _
  // Predicated region
  $region6: #{_conv_bn.3} parent=0 // pred_check
    _
  $region7: #{_conv_bn.3} parent=0 // pred_check_branch
    %11 = sbr.rel (0) target = $region9
  $region8: #{_conv_bn.3} parent=0 // pred_region
    _
  $region9: #{_conv_bn.3} parent=0 // pred_fallthru
    _
  // Predicated region
  $region10: #{_conv_bn.3} parent=0 // pred_check
    _
  $region11: #{_conv_bn.3} parent=0 // pred_check_branch
    %13 = sbr.rel (0) target = $region13
  $region12: #{_conv_bn.3} parent=0 // pred_region
    _
  $region13: #{_conv_bn.3} parent=0 // pred_fallthru
    _
  %v14 = vld [vmem:[%s0] sm:$0xff]
  %v15 = vld [vmem:[%s0 + $0x8] sm:$0xff]
  %v16 = vld [vmem:[%s0 + $0x10] sm:$0xff]
  %v17 = vld [vmem:[%s0 + $0x18] sm:$0xff]
  %v18 = vld [vmem:[%s0 + $0x20] sm:$0xff]
  %v19 = vld [vmem:[%s0 + $0x28] sm:$0xff]
  %v20 = vld [vmem:[%s0 + $0x30] sm:$0xff]
  %v21 = vld [vmem:[%s0 + $0x38] sm:$0xff]
  %v22 = vld [vmem:[%s0 + $0x40] sm:$0xff]
  %v23 = vld [vmem:[%s0 + $0x48] sm:$0xff]
  %v24 = vld [vmem:[%s0 + $0x50] sm:$0xff]
  %v25 = vld [vmem:[%s0 + $0x58] sm:$0xff]
  %v26 = vld [vmem:[%s0 + $0x60] sm:$0xff]
  %v27 = vld [vmem:[%s0 + $0x68] sm:$0xff]
  %v28 = vld [vmem:[%s0 + $0x70] sm:$0xff]
  %v29 = vld [vmem:[%s0 + $0x78] sm:$0xff]
  %v30 = vld [vmem:[%s0 + $0x80] sm:$0xff]
  %v31 = vld [vmem:[%s0 + $0x88] sm:$0xff]
  %v32 = vld [vmem:[%s0 + $0x90] sm:$0xff]
  %v33 = vld [vmem:[%s0 + $0x98] sm:$0xff]
  %v34 = vld [vmem:[%s0 + $0xa0] sm:$0xff]
  %v35 = vld [vmem:[%s0 + $0xa8] sm:$0xff]
  %v36 = vld [vmem:[%s0 + $0xb0] sm:$0xff]
  %v37 = vld [vmem:[%s0 + $0xb8] sm:$0xff]
  %v38 = vld [vmem:[%s0 + $0xc0] sm:$0xff]
  %v39 = vld [vmem:[%s0 + $0xc8] sm:$0xff]
  %v40 = vld [vmem:[%s0 + $0xd0] sm:$0xff]
  %v41 = vld [vmem:[%s0 + $0xd8] sm:$0xff]
  %v42 = vld [vmem:[%s0 + $0xe0] sm:$0xff]
  %v43 = vld [vmem:[%s0 + $0xe8] sm:$0xff]
  %v44 = vld [vmem:[%s0 + $0xf0] sm:$0xff]
  %v45 = vld [vmem:[%s0 + $0xf8] sm:$0xff]
  %v46 = vld [vmem:[%s0 + $0x100] sm:$0xff]
  %v47 = vld [vmem:[%s0 + $0x108] sm:$0xff]
  %v48 = vld [vmem:[%s0 + $0x110] sm:$0xff]
  %v49 = vld [vmem:[%s0 + $0x118] sm:$0xff]
  %v50 = vld [vmem:[%s0 + $0x120] sm:$0xff]
  %v51 = vld [vmem:[%s0 + $0x128] sm:$0xff]
  %v52 = vld [vmem:[%s0 + $0x130] sm:$0xff]
  %v53 = vld [vmem:[%s0 + $0x138] sm:$0xff]
  %v54 = vld [vmem:[%s0 + $0x140] sm:$0xff]
  %v55 = vld [vmem:[%s0 + $0x148] sm:$0xff]
  %v56 = vld [vmem:[%s0 + $0x150] sm:$0xff]
  %v57 = vld [vmem:[%s0 + $0x158] sm:$0xff]
  %v58 = vld [vmem:[%s0 + $0x160] sm:$0xff]
  %v59 = vld [vmem:[%s0 + $0x168] sm:$0xff]
  %v60 = vld [vmem:[%s0 + $0x170] sm:$0xff]
  %v61 = vld [vmem:[%s0 + $0x178] sm:$0xff]
  %v62 = vld [vmem:[%s0 + $0x180] sm:$0xff]
  %v63 = vld [vmem:[%s0 + $0x188] sm:$0xff]
  %v64 = vld [vmem:[%s0 + $0x190] sm:$0xff]
  %v65 = vld [vmem:[%s0 + $0x198] sm:$0xff]
  %v66 = vld [vmem:[%s0 + $0x1a0] sm:$0xff]
  %v67 = vld [vmem:[%s0 + $0x1a8] sm:$0xff]
  %v68 = vld [vmem:[%s0 + $0x1b0] sm:$0xff]
  %v69 = vld [vmem:[%s0 + $0x1b8] sm:$0xff]
  %v70 = vld [vmem:[%s0 + $0x1c0] sm:$0xff]
  %v71 = vld [vmem:[%s0 + $0x1c8] sm:$0xff]
  %v72 = vld [vmem:[%s0 + $0x1d0] sm:$0xff]
  %v73 = vld [vmem:[%s0 + $0x1d8] sm:$0xff]
  %v74 = vld [vmem:[%s0 + $0x1e0] sm:$0xff]
  %v75 = vld [vmem:[%s0 + $0x1e8] sm:$0xff]
  %v76 = vld [vmem:[%s0 + $0x1f0] sm:$0xff]
  %v77 = vld [vmem:[%s0 + $0x1f8] sm:$0xff]
  %v78 = vld [vmem:[%s1] sm:$0x1]
  %v80 = vperm.slane %v78, 0
  %v82 = vmul.f32 %v14, %v80
  %v83 = vmul.f32 %v15, %v80
  %v84 = vmul.f32 %v16, %v80
  %v85 = vmul.f32 %v17, %v80
  %v86 = vmul.f32 %v18, %v80
  %v87 = vmul.f32 %v19, %v80
  %v88 = vmul.f32 %v20, %v80
  %v89 = vmul.f32 %v21, %v80
  %v90 = vmul.f32 %v22, %v80
  %v91 = vmul.f32 %v23, %v80
  %v92 = vmul.f32 %v24, %v80
  %v93 = vmul.f32 %v25, %v80
  %v94 = vmul.f32 %v26, %v80
  %v95 = vmul.f32 %v27, %v80
  %v96 = vmul.f32 %v28, %v80
  %v97 = vmul.f32 %v29, %v80
  %v98 = vmul.f32 %v30, %v80
  %v99 = vmul.f32 %v31, %v80
  %v100 = vmul.f32 %v32, %v80
  %v101 = vmul.f32 %v33, %v80
  %v102 = vmul.f32 %v34, %v80
  %v103 = vmul.f32 %v35, %v80
  %v104 = vmul.f32 %v36, %v80
  %v105 = vmul.f32 %v37, %v80
  %v106 = vmul.f32 %v38, %v80
  %v107 = vmul.f32 %v39, %v80
  %v108 = vmul.f32 %v40, %v80
  %v109 = vmul.f32 %v41, %v80
  %v110 = vmul.f32 %v42, %v80
  %v111 = vmul.f32 %v43, %v80
  %v112 = vmul.f32 %v44, %v80
  %v113 = vmul.f32 %v45, %v80
  %v114 = vmul.f32 %v46, %v80
  %v115 = vmul.f32 %v47, %v80
  %v116 = vmul.f32 %v48, %v80
  %v117 = vmul.f32 %v49, %v80
  %v118 = vmul.f32 %v50, %v80
  %v119 = vmul.f32 %v51, %v80
  %v120 = vmul.f32 %v52, %v80
  %v121 = vmul.f32 %v53, %v80
  %v122 = vmul.f32 %v54, %v80
  %v123 = vmul.f32 %v55, %v80
  %v124 = vmul.f32 %v56, %v80
  %v125 = vmul.f32 %v57, %v80
  %v126 = vmul.f32 %v58, %v80
  %v127 = vmul.f32 %v59, %v80
  %v128 = vmul.f32 %v60, %v80
  %v129 = vmul.f32 %v61, %v80
  %v130 = vmul.f32 %v62, %v80
  %v131 = vmul.f32 %v63, %v80
  %v132 = vmul.f32 %v64, %v80
  %v133 = vmul.f32 %v65, %v80
  %v134 = vmul.f32 %v66, %v80
  %v135 = vmul.f32 %v67, %v80
  %v136 = vmul.f32 %v68, %v80
  %v137 = vmul.f32 %v69, %v80
  %v138 = vmul.f32 %v70, %v80
  %v139 = vmul.f32 %v71, %v80
  %v140 = vmul.f32 %v72, %v80
  %v141 = vmul.f32 %v73, %v80
  %v142 = vmul.f32 %v74, %v80
  %v143 = vmul.f32 %v75, %v80
  %v144 = vmul.f32 %v76, %v80
  %v145 = vmul.f32 %v77, %v80
  %v146 = vld [vmem:[%s2] sm:$0x1]
  %v148 = vperm.slane %v146, 0
  %v150 = vadd.f32 %v82, %v148
  %v151 = vadd.f32 %v83, %v148
  %v152 = vadd.f32 %v84, %v148
  %v153 = vadd.f32 %v85, %v148
  %v154 = vadd.f32 %v86, %v148
  %v155 = vadd.f32 %v87, %v148
  %v156 = vadd.f32 %v88, %v148
  %v157 = vadd.f32 %v89, %v148
  %v158 = vadd.f32 %v90, %v148
  %v159 = vadd.f32 %v91, %v148
  %v160 = vadd.f32 %v92, %v148
  %v161 = vadd.f32 %v93, %v148
  %v162 = vadd.f32 %v94, %v148
  %v163 = vadd.f32 %v95, %v148
  %v164 = vadd.f32 %v96, %v148
  %v165 = vadd.f32 %v97, %v148
  %v166 = vadd.f32 %v98, %v148
  %v167 = vadd.f32 %v99, %v148
  %v168 = vadd.f32 %v100, %v148
  %v169 = vadd.f32 %v101, %v148
  %v170 = vadd.f32 %v102, %v148
  %v171 = vadd.f32 %v103, %v148
  %v172 = vadd.f32 %v104, %v148
  %v173 = vadd.f32 %v105, %v148
  %v174 = vadd.f32 %v106, %v148
  %v175 = vadd.f32 %v107, %v148
  %v176 = vadd.f32 %v108, %v148
  %v177 = vadd.f32 %v109, %v148
  %v178 = vadd.f32 %v110, %v148
  %v179 = vadd.f32 %v111, %v148
  %v180 = vadd.f32 %v112, %v148
  %v181 = vadd.f32 %v113, %v148
  %v182 = vadd.f32 %v114, %v148
  %v183 = vadd.f32 %v115, %v148
  %v184 = vadd.f32 %v116, %v148
  %v185 = vadd.f32 %v117, %v148
  %v186 = vadd.f32 %v118, %v148
  %v187 = vadd.f32 %v119, %v148
  %v188 = vadd.f32 %v120, %v148
  %v189 = vadd.f32 %v121, %v148
  %v190 = vadd.f32 %v122, %v148
  %v191 = vadd.f32 %v123, %v148
  %v192 = vadd.f32 %v124, %v148
  %v193 = vadd.f32 %v125, %v148
  %v194 = vadd.f32 %v126, %v148
  %v195 = vadd.f32 %v127, %v148
  %v196 = vadd.f32 %v128, %v148
  %v197 = vadd.f32 %v129, %v148
  %v198 = vadd.f32 %v130, %v148
  %v199 = vadd.f32 %v131, %v148
  %v200 = vadd.f32 %v132, %v148
  %v201 = vadd.f32 %v133, %v148
  %v202 = vadd.f32 %v134, %v148
  %v203 = vadd.f32 %v135, %v148
  %v204 = vadd.f32 %v136, %v148
  %v205 = vadd.f32 %v137, %v148
  %v206 = vadd.f32 %v138, %v148
  %v207 = vadd.f32 %v139, %v148
  %v208 = vadd.f32 %v140, %v148
  %v209 = vadd.f32 %v141, %v148
  %v210 = vadd.f32 %v142, %v148
  %v211 = vadd.f32 %v143, %v148
  %v212 = vadd.f32 %v144, %v148
  %v213 = vadd.f32 %v145, %v148
  %214 = vst [vmem:[%s3] sm:$0xff] %v150
  %215 = vst [vmem:[%s3 + $0x8] sm:$0xff] %v151
  %216 = vst [vmem:[%s3 + $0x10] sm:$0xff] %v152
  %217 = vst [vmem:[%s3 + $0x18] sm:$0xff] %v153
  %218 = vst [vmem:[%s3 + $0x20] sm:$0xff] %v154
  %219 = vst [vmem:[%s3 + $0x28] sm:$0xff] %v155
  %220 = vst [vmem:[%s3 + $0x30] sm:$0xff] %v156
  %221 = vst [vmem:[%s3 + $0x38] sm:$0xff] %v157
  %222 = vst [vmem:[%s3 + $0x40] sm:$0xff] %v158
  %223 = vst [vmem:[%s3 + $0x48] sm:$0xff] %v159
  %224 = vst [vmem:[%s3 + $0x50] sm:$0xff] %v160
  %225 = vst [vmem:[%s3 + $0x58] sm:$0xff] %v161
  %226 = vst [vmem:[%s3 + $0x60] sm:$0xff] %v162
  %227 = vst [vmem:[%s3 + $0x68] sm:$0xff] %v163
  %228 = vst [vmem:[%s3 + $0x70] sm:$0xff] %v164
  %229 = vst [vmem:[%s3 + $0x78] sm:$0xff] %v165
  %230 = vst [vmem:[%s3 + $0x80] sm:$0xff] %v166
  %231 = vst [vmem:[%s3 + $0x88] sm:$0xff] %v167
  %232 = vst [vmem:[%s3 + $0x90] sm:$0xff] %v168
  %233 = vst [vmem:[%s3 + $0x98] sm:$0xff] %v169
  %234 = vst [vmem:[%s3 + $0xa0] sm:$0xff] %v170
  %235 = vst [vmem:[%s3 + $0xa8] sm:$0xff] %v171
  %236 = vst [vmem:[%s3 + $0xb0] sm:$0xff] %v172
  %237 = vst [vmem:[%s3 + $0xb8] sm:$0xff] %v173
  %238 = vst [vmem:[%s3 + $0xc0] sm:$0xff] %v174
  %239 = vst [vmem:[%s3 + $0xc8] sm:$0xff] %v175
  %240 = vst [vmem:[%s3 + $0xd0] sm:$0xff] %v176
  %241 = vst [vmem:[%s3 + $0xd8] sm:$0xff] %v177
  %242 = vst [vmem:[%s3 + $0xe0] sm:$0xff] %v178
  %243 = vst [vmem:[%s3 + $0xe8] sm:$0xff] %v179
  %244 = vst [vmem:[%s3 + $0xf0] sm:$0xff] %v180
  %245 = vst [vmem:[%s3 + $0xf8] sm:$0xff] %v181
  %246 = vst [vmem:[%s3 + $0x100] sm:$0xff] %v182
  %247 = vst [vmem:[%s3 + $0x108] sm:$0xff] %v183
  %248 = vst [vmem:[%s3 + $0x110] sm:$0xff] %v184
  %249 = vst [vmem:[%s3 + $0x118] sm:$0xff] %v185
  %250 = vst [vmem:[%s3 + $0x120] sm:$0xff] %v186
  %251 = vst [vmem:[%s3 + $0x128] sm:$0xff] %v187
  %252 = vst [vmem:[%s3 + $0x130] sm:$0xff] %v188
  %253 = vst [vmem:[%s3 + $0x138] sm:$0xff] %v189
  %254 = vst [vmem:[%s3 + $0x140] sm:$0xff] %v190
  %255 = vst [vmem:[%s3 + $0x148] sm:$0xff] %v191
  %256 = vst [vmem:[%s3 + $0x150] sm:$0xff] %v192
  %257 = vst [vmem:[%s3 + $0x158] sm:$0xff] %v193
  %258 = vst [vmem:[%s3 + $0x160] sm:$0xff] %v194
  %259 = vst [vmem:[%s3 + $0x168] sm:$0xff] %v195
  %260 = vst [vmem:[%s3 + $0x170] sm:$0xff] %v196
  %261 = vst [vmem:[%s3 + $0x178] sm:$0xff] %v197
  %262 = vst [vmem:[%s3 + $0x180] sm:$0xff] %v198
  %263 = vst [vmem:[%s3 + $0x188] sm:$0xff] %v199
  %264 = vst [vmem:[%s3 + $0x190] sm:$0xff] %v200
  %265 = vst [vmem:[%s3 + $0x198] sm:$0xff] %v201
  %266 = vst [vmem:[%s3 + $0x1a0] sm:$0xff] %v202
  %267 = vst [vmem:[%s3 + $0x1a8] sm:$0xff] %v203
  %268 = vst [vmem:[%s3 + $0x1b0] sm:$0xff] %v204
  %269 = vst [vmem:[%s3 + $0x1b8] sm:$0xff] %v205
  %270 = vst [vmem:[%s3 + $0x1c0] sm:$0xff] %v206
  %271 = vst [vmem:[%s3 + $0x1c8] sm:$0xff] %v207
  %272 = vst [vmem:[%s3 + $0x1d0] sm:$0xff] %v208
  %273 = vst [vmem:[%s3 + $0x1d8] sm:$0xff] %v209
  %274 = vst [vmem:[%s3 + $0x1e0] sm:$0xff] %v210
  %275 = vst [vmem:[%s3 + $0x1e8] sm:$0xff] %v211
  %276 = vst [vmem:[%s3 + $0x1f0] sm:$0xff] %v212
  %277 = vst [vmem:[%s3 + $0x1f8] sm:$0xff] %v213
  // Predicated region
  $region14: #{_conv_bn.3} parent=0 // pred_check
    _
  $region15: #{_conv_bn.3} parent=0 // pred_check_branch
    %279 = sbr.rel (0) target = $region17
  $region16: #{_conv_bn.3} parent=0 // pred_region
    _
  $region17: #{_conv_bn.3} parent=0 // pred_fallthru
    _
  // Predicated region
  $region18: #{_conv_bn.3} parent=0 // pred_check
    _
  $region19: #{_conv_bn.3} parent=0 // pred_check_branch
    %281 = sbr.rel (0) target = $region21
  $region20: #{_conv_bn.3} parent=0 // pred_region
    _
  $region21: #{_conv_bn.3} parent=0 // pred_fallthru
    _

// kernel: _conv_bn.2
$region0: #{_conv_bn.2}
  #allocation0 [shape = 'u32[]', space=smem, size = 0x4, offset = 0x4, fixed_abs, tag = 'smem constant byte address 0x4 - core index']
  #allocation1 [shape = 'u32[72,128]{1,0:T(1,128)}', space=vmem, size = 0x9000, scoped, tag = 'internal scratch']
  %s0 = inlined_call_operand.vmem [shape: bf16[512,128], index: 0, kind: input, shape index: {}]
  %s1 = inlined_call_operand.vmem [shape: bf16[128,128], index: 1, kind: input, shape index: {}]
  %s2 = inlined_call_operand.vmem [shape: f32[512,128], index: 2, kind: output, shape index: {0}]
  %s3 = inlined_call_operand.vmem [shape: f32[8,128], index: 3, kind: output, shape index: {1}]
  %4 = xla_tuple %s2, %s3
  %s5 = sld [smem:[#allocation0]]
  $region26: #{_conv_bn.2} parent=0
    _
  %s7 = ssub.s32 1, %s5
  %s8 = scalar_select 0, %s7, %s5
  // Predicated region
  $region2: #{_conv_bn.2} parent=0 // pred_check
    _
  $region3: #{_conv_bn.2} parent=0 // pred_check_branch
    %10 = sbr.rel (0) target = $region5
  $region4: #{_conv_bn.2} parent=0 // pred_region
    _
  $region5: #{_conv_bn.2} parent=0 // pred_fallthru
    _
  // Predicated region
  $region6: #{_conv_bn.2} parent=0 // pred_check
    _
  $region7: #{_conv_bn.2} parent=0 // pred_check_branch
    %12 = sbr.rel (0) target = $region9
  $region8: #{_conv_bn.2} parent=0 // pred_region
    _
  $region9: #{_conv_bn.2} parent=0 // pred_fallthru
    _
  %v13 = vld [vmem:[%s0] sm:$0xf]
  %v14 = vld [vmem:[%s0 + $0x4] sm:$0xf]
  %v15 = vld [vmem:[%s0 + $0x8] sm:$0xf]
  %v16 = vld [vmem:[%s0 + $0xc] sm:$0xf]
  %v17 = vld [vmem:[%s0 + $0x10] sm:$0xf]
  %v18 = vld [vmem:[%s0 + $0x14] sm:$0xf]
  %v19 = vld [vmem:[%s0 + $0x18] sm:$0xf]
  %v20 = vld [vmem:[%s0 + $0x1c] sm:$0xf]
  %v21 = vld [vmem:[%s0 + $0x20] sm:$0xf]
  %v22 = vld [vmem:[%s0 + $0x24] sm:$0xf]
  %v23 = vld [vmem:[%s0 + $0x28] sm:$0xf]
  %v24 = vld [vmem:[%s0 + $0x2c] sm:$0xf]
  %v25 = vld [vmem:[%s0 + $0x30] sm:$0xf]
  %v26 = vld [vmem:[%s0 + $0x34] sm:$0xf]
  %v27 = vld [vmem:[%s0 + $0x38] sm:$0xf]
  %v28 = vld [vmem:[%s0 + $0x3c] sm:$0xf]
  %v29 = vld [vmem:[%s0 + $0x40] sm:$0xf]
  %v30 = vld [vmem:[%s0 + $0x44] sm:$0xf]
  %v31 = vld [vmem:[%s0 + $0x48] sm:$0xf]
  %v32 = vld [vmem:[%s0 + $0x4c] sm:$0xf]
  %v33 = vld [vmem:[%s0 + $0x50] sm:$0xf]
  %v34 = vld [vmem:[%s0 + $0x54] sm:$0xf]
  %v35 = vld [vmem:[%s0 + $0x58] sm:$0xf]
  %v36 = vld [vmem:[%s0 + $0x5c] sm:$0xf]
  %v37 = vld [vmem:[%s0 + $0x60] sm:$0xf]
  %v38 = vld [vmem:[%s0 + $0x64] sm:$0xf]
  %v39 = vld [vmem:[%s0 + $0x68] sm:$0xf]
  %v40 = vld [vmem:[%s0 + $0x6c] sm:$0xf]
  %v41 = vld [vmem:[%s0 + $0x70] sm:$0xf]
  %v42 = vld [vmem:[%s0 + $0x74] sm:$0xf]
  %v43 = vld [vmem:[%s0 + $0x78] sm:$0xf]
  %v44 = vld [vmem:[%s0 + $0x7c] sm:$0xf]
  %v45 = vld [vmem:[%s0 + $0x80] sm:$0xf]
  %v46 = vld [vmem:[%s0 + $0x84] sm:$0xf]
  %v47 = vld [vmem:[%s0 + $0x88] sm:$0xf]
  %v48 = vld [vmem:[%s0 + $0x8c] sm:$0xf]
  %v49 = vld [vmem:[%s0 + $0x90] sm:$0xf]
  %v50 = vld [vmem:[%s0 + $0x94] sm:$0xf]
  %v51 = vld [vmem:[%s0 + $0x98] sm:$0xf]
  %v52 = vld [vmem:[%s0 + $0x9c] sm:$0xf]
  %v53 = vld [vmem:[%s0 + $0xa0] sm:$0xf]
  %v54 = vld [vmem:[%s0 + $0xa4] sm:$0xf]
  %v55 = vld [vmem:[%s0 + $0xa8] sm:$0xf]
  %v56 = vld [vmem:[%s0 + $0xac] sm:$0xf]
  %v57 = vld [vmem:[%s0 + $0xb0] sm:$0xf]
  %v58 = vld [vmem:[%s0 + $0xb4] sm:$0xf]
  %v59 = vld [vmem:[%s0 + $0xb8] sm:$0xf]
  %v60 = vld [vmem:[%s0 + $0xbc] sm:$0xf]
  %v61 = vld [vmem:[%s0 + $0xc0] sm:$0xf]
  %v62 = vld [vmem:[%s0 + $0xc4] sm:$0xf]
  %v63 = vld [vmem:[%s0 + $0xc8] sm:$0xf]
  %v64 = vld [vmem:[%s0 + $0xcc] sm:$0xf]
  %v65 = vld [vmem:[%s0 + $0xd0] sm:$0xf]
  %v66 = vld [vmem:[%s0 + $0xd4] sm:$0xf]
  %v67 = vld [vmem:[%s0 + $0xd8] sm:$0xf]
  %v68 = vld [vmem:[%s0 + $0xdc] sm:$0xf]
  %v69 = vld [vmem:[%s0 + $0xe0] sm:$0xf]
  %v70 = vld [vmem:[%s0 + $0xe4] sm:$0xf]
  %v71 = vld [vmem:[%s0 + $0xe8] sm:$0xf]
  %v72 = vld [vmem:[%s0 + $0xec] sm:$0xf]
  %v73 = vld [vmem:[%s0 + $0xf0] sm:$0xf]
  %v74 = vld [vmem:[%s0 + $0xf4] sm:$0xf]
  %v75 = vld [vmem:[%s0 + $0xf8] sm:$0xf]
  %v76 = vld [vmem:[%s0 + $0xfc] sm:$0xf]
  %v77 = vld [vmem:[%s1] sm:$0xf]
  %v78 = vld [vmem:[%s1 + $0x4] sm:$0xf]
  %v79 = vld [vmem:[%s1 + $0x8] sm:$0xf]
  %v80 = vld [vmem:[%s1 + $0xc] sm:$0xf]
  %v81 = vld [vmem:[%s1 + $0x10] sm:$0xf]
  %v82 = vld [vmem:[%s1 + $0x14] sm:$0xf]
  %v83 = vld [vmem:[%s1 + $0x18] sm:$0xf]
  %v84 = vld [vmem:[%s1 + $0x1c] sm:$0xf]
  %v85 = vld [vmem:[%s1 + $0x20] sm:$0xf]
  %v86 = vld [vmem:[%s1 + $0x24] sm:$0xf]
  %v87 = vld [vmem:[%s1 + $0x28] sm:$0xf]
  %v88 = vld [vmem:[%s1 + $0x2c] sm:$0xf]
  %v89 = vld [vmem:[%s1 + $0x30] sm:$0xf]
  %v90 = vld [vmem:[%s1 + $0x34] sm:$0xf]
  %v91 = vld [vmem:[%s1 + $0x38] sm:$0xf]
  %v92 = vld [vmem:[%s1 + $0x3c] sm:$0xf]
  %v157 = vunpack.c.l.b16 %v13
  %v158 = vunpack.c.l.b16 %v14
  %v159 = vunpack.c.l.b16 %v15
  %v160 = vunpack.c.l.b16 %v16
  %v161 = vunpack.c.l.b16 %v17
  %v162 = vunpack.c.l.b16 %v18
  %v163 = vunpack.c.l.b16 %v19
  %v164 = vunpack.c.l.b16 %v20
  %v165 = vunpack.c.l.b16 %v21
  %v166 = vunpack.c.l.b16 %v22
  %v167 = vunpack.c.l.b16 %v23
  %v168 = vunpack.c.l.b16 %v24
  %v169 = vunpack.c.l.b16 %v25
  %v170 = vunpack.c.l.b16 %v26
  %v171 = vunpack.c.l.b16 %v27
  %v172 = vunpack.c.l.b16 %v28
  %v173 = vunpack.c.l.b16 %v29
  %v174 = vunpack.c.l.b16 %v30
  %v175 = vunpack.c.l.b16 %v31
  %v176 = vunpack.c.l.b16 %v32
  %v177 = vunpack.c.l.b16 %v33
  %v178 = vunpack.c.l.b16 %v34
  %v179 = vunpack.c.l.b16 %v35
  %v180 = vunpack.c.l.b16 %v36
  %v181 = vunpack.c.l.b16 %v37
  %v182 = vunpack.c.l.b16 %v38
  %v183 = vunpack.c.l.b16 %v39
  %v184 = vunpack.c.l.b16 %v40
  %v185 = vunpack.c.l.b16 %v41
  %v186 = vunpack.c.l.b16 %v42
  %v187 = vunpack.c.l.b16 %v43
  %v188 = vunpack.c.l.b16 %v44
  %v189 = vunpack.c.l.b16 %v45
  %v190 = vunpack.c.l.b16 %v46
  %v191 = vunpack.c.l.b16 %v47
  %v192 = vunpack.c.l.b16 %v48
  %v193 = vunpack.c.l.b16 %v49
  %v194 = vunpack.c.l.b16 %v50
  %v195 = vunpack.c.l.b16 %v51
  %v196 = vunpack.c.l.b16 %v52
  %v197 = vunpack.c.l.b16 %v53
  %v198 = vunpack.c.l.b16 %v54
  %v199 = vunpack.c.l.b16 %v55
  %v200 = vunpack.c.l.b16 %v56
  %v201 = vunpack.c.l.b16 %v57
  %v202 = vunpack.c.l.b16 %v58
  %v203 = vunpack.c.l.b16 %v59
  %v204 = vunpack.c.l.b16 %v60
  %v205 = vunpack.c.l.b16 %v61
  %v206 = vunpack.c.l.b16 %v62
  %v207 = vunpack.c.l.b16 %v63
  %v208 = vunpack.c.l.b16 %v64
  %v209 = vunpack.c.l.b16 %v65
  %v210 = vunpack.c.l.b16 %v66
  %v211 = vunpack.c.l.b16 %v67
  %v212 = vunpack.c.l.b16 %v68
  %v213 = vunpack.c.l.b16 %v69
  %v214 = vunpack.c.l.b16 %v70
  %v215 = vunpack.c.l.b16 %v71
  %v216 = vunpack.c.l.b16 %v72
  %v217 = vunpack.c.l.b16 %v73
  %v218 = vunpack.c.l.b16 %v74
  %v219 = vunpack.c.l.b16 %v75
  %v220 = vunpack.c.l.b16 %v76
  %v221 = vpack.c.b16 %v158, %v157
  %v222 = vpack.c.b16 %v160, %v159
  %v223 = vpack.c.b16 %v162, %v161
  %v224 = vpack.c.b16 %v164, %v163
  %v225 = vpack.c.b16 %v166, %v165
  %v226 = vpack.c.b16 %v168, %v167
  %v227 = vpack.c.b16 %v170, %v169
  %v228 = vpack.c.b16 %v172, %v171
  %v229 = vpack.c.b16 %v174, %v173
  %v230 = vpack.c.b16 %v176, %v175
  %v231 = vpack.c.b16 %v178, %v177
  %v232 = vpack.c.b16 %v180, %v179
  %v233 = vpack.c.b16 %v182, %v181
  %v234 = vpack.c.b16 %v184, %v183
  %v235 = vpack.c.b16 %v186, %v185
  %v236 = vpack.c.b16 %v188, %v187
  %v237 = vpack.c.b16 %v190, %v189
  %v238 = vpack.c.b16 %v192, %v191
  %v239 = vpack.c.b16 %v194, %v193
  %v240 = vpack.c.b16 %v196, %v195
  %v241 = vpack.c.b16 %v198, %v197
  %v242 = vpack.c.b16 %v200, %v199
  %v243 = vpack.c.b16 %v202, %v201
  %v244 = vpack.c.b16 %v204, %v203
  %v245 = vpack.c.b16 %v206, %v205
  %v246 = vpack.c.b16 %v208, %v207
  %v247 = vpack.c.b16 %v210, %v209
  %v248 = vpack.c.b16 %v212, %v211
  %v249 = vpack.c.b16 %v214, %v213
  %v250 = vpack.c.b16 %v216, %v215
  %v251 = vpack.c.b16 %v218, %v217
  %v252 = vpack.c.b16 %v220, %v219
  %v301 = vunpack.c.l.b16 %v77
  %v302 = vunpack.c.l.b16 %v78
  %v303 = vunpack.c.l.b16 %v79
  %v304 = vunpack.c.l.b16 %v80
  %v305 = vunpack.c.l.b16 %v81
  %v306 = vunpack.c.l.b16 %v82
  %v307 = vunpack.c.l.b16 %v83
  %v308 = vunpack.c.l.b16 %v84
  %v309 = vunpack.c.l.b16 %v85
  %v310 = vunpack.c.l.b16 %v86
  %v311 = vunpack.c.l.b16 %v87
  %v312 = vunpack.c.l.b16 %v88
  %v313 = vunpack.c.l.b16 %v89
  %v314 = vunpack.c.l.b16 %v90
  %v315 = vunpack.c.l.b16 %v91
  %v316 = vunpack.c.l.b16 %v92
  %v317 = vpack.c.b16 %v302, %v301
  %v318 = vpack.c.b16 %v304, %v303
  %v319 = vpack.c.b16 %v306, %v305
  %v320 = vpack.c.b16 %v308, %v307
  %v321 = vpack.c.b16 %v310, %v309
  %v322 = vpack.c.b16 %v312, %v311
  %v323 = vpack.c.b16 %v314, %v313
  %v324 = vpack.c.b16 %v316, %v315
  %333 = vmatpush.bf16.msra.mxu0 %v324
  %334 = vmatpush.bf16.msra.mxu0 %v323
  %335 = vmatpush.bf16.msra.mxu0 %v322
  %336 = vmatpush.bf16.msra.mxu0 %v321
  %337 = vmatpush.bf16.msra.mxu0 %v320
  %338 = vmatpush.bf16.msra.mxu0 %v319
  %339 = vmatpush.bf16.msra.mxu0 %v318
  %340 = vmatpush.bf16.msra.mxu0 %v317
  %341 = vmatmul.bf16.gmra.mxu0 %v221
  %v342 = vpop.f32.mrf.mxu0
  %v343 = vadd.f32 0.0, %v342
  %v344 = vpop.f32.mrf.mxu0
  %v345 = vadd.f32 0.0, %v344
  %346 = vmatmul.bf16.gmra.mxu0 %v222
  %v347 = vpop.f32.mrf.mxu0
  %v348 = vadd.f32 0.0, %v347
  %v349 = vpop.f32.mrf.mxu0
  %v350 = vadd.f32 0.0, %v349
  %351 = vmatmul.bf16.gmra.mxu0 %v223
  %v352 = vpop.f32.mrf.mxu0
  %v353 = vadd.f32 0.0, %v352
  %v354 = vpop.f32.mrf.mxu0
  %v355 = vadd.f32 0.0, %v354
  %356 = vmatmul.bf16.gmra.mxu0 %v224
  %v357 = vpop.f32.mrf.mxu0
  %v358 = vadd.f32 0.0, %v357
  %v359 = vpop.f32.mrf.mxu0
  %v360 = vadd.f32 0.0, %v359
  %361 = vmatmul.bf16.gmra.mxu0 %v225
  %v362 = vpop.f32.mrf.mxu0
  %v363 = vadd.f32 0.0, %v362
  %v364 = vpop.f32.mrf.mxu0
  %v365 = vadd.f32 0.0, %v364
  %366 = vmatmul.bf16.gmra.mxu0 %v226
  %v367 = vpop.f32.mrf.mxu0
  %v368 = vadd.f32 0.0, %v367
  %v369 = vpop.f32.mrf.mxu0
  %v370 = vadd.f32 0.0, %v369
  %371 = vmatmul.bf16.gmra.mxu0 %v227
  %v372 = vpop.f32.mrf.mxu0
  %v373 = vadd.f32 0.0, %v372
  %v374 = vpop.f32.mrf.mxu0
  %v375 = vadd.f32 0.0, %v374
  %376 = vmatmul.bf16.gmra.mxu0 %v228
  %v377 = vpop.f32.mrf.mxu0
  %v378 = vadd.f32 0.0, %v377
  %v379 = vpop.f32.mrf.mxu0
  %v380 = vadd.f32 0.0, %v379
  %381 = vmatmul.bf16.gmra.mxu0 %v229
  %v382 = vpop.f32.mrf.mxu0
  %v383 = vadd.f32 0.0, %v382
  %v384 = vpop.f32.mrf.mxu0
  %v385 = vadd.f32 0.0, %v384
  %386 = vmatmul.bf16.gmra.mxu0 %v230
  %v387 = vpop.f32.mrf.mxu0
  %v388 = vadd.f32 0.0, %v387
  %v389 = vpop.f32.mrf.mxu0
  %v390 = vadd.f32 0.0, %v389
  %391 = vmatmul.bf16.gmra.mxu0 %v231
  %v392 = vpop.f32.mrf.mxu0
  %v393 = vadd.f32 0.0, %v392
  %v394 = vpop.f32.mrf.mxu0
  %v395 = vadd.f32 0.0, %v394
  %396 = vmatmul.bf16.gmra.mxu0 %v232
  %v397 = vpop.f32.mrf.mxu0
  %v398 = vadd.f32 0.0, %v397
  %v399 = vpop.f32.mrf.mxu0
  %v400 = vadd.f32 0.0, %v399
  %401 = vmatmul.bf16.gmra.mxu0 %v233
  %v402 = vpop.f32.mrf.mxu0
  %v403 = vadd.f32 0.0, %v402
  %v404 = vpop.f32.mrf.mxu0
  %v405 = vadd.f32 0.0, %v404
  %406 = vmatmul.bf16.gmra.mxu0 %v234
  %v407 = vpop.f32.mrf.mxu0
  %v408 = vadd.f32 0.0, %v407
  %v409 = vpop.f32.mrf.mxu0
  %v410 = vadd.f32 0.0, %v409
  %411 = vmatmul.bf16.gmra.mxu0 %v235
  %v412 = vpop.f32.mrf.mxu0
  %v413 = vadd.f32 0.0, %v412
  %v414 = vpop.f32.mrf.mxu0
  %v415 = vadd.f32 0.0, %v414
  %416 = vmatmul.bf16.gmra.mxu0 %v236
  %v417 = vpop.f32.mrf.mxu0
  %v418 = vadd.f32 0.0, %v417
  %v419 = vpop.f32.mrf.mxu0
  %v420 = vadd.f32 0.0, %v419
  %421 = vmatmul.bf16.gmra.mxu0 %v237
  %v422 = vpop.f32.mrf.mxu0
  %v423 = vadd.f32 0.0, %v422
  %v424 = vpop.f32.mrf.mxu0
  %v425 = vadd.f32 0.0, %v424
  %426 = vmatmul.bf16.gmra.mxu0 %v238
  %v427 = vpop.f32.mrf.mxu0
  %v428 = vadd.f32 0.0, %v427
  %v429 = vpop.f32.mrf.mxu0
  %v430 = vadd.f32 0.0, %v429
  %431 = vmatmul.bf16.gmra.mxu0 %v239
  %v432 = vpop.f32.mrf.mxu0
  %v433 = vadd.f32 0.0, %v432
  %v434 = vpop.f32.mrf.mxu0
  %v435 = vadd.f32 0.0, %v434
  %436 = vmatmul.bf16.gmra.mxu0 %v240
  %v437 = vpop.f32.mrf.mxu0
  %v438 = vadd.f32 0.0, %v437
  %v439 = vpop.f32.mrf.mxu0
  %v440 = vadd.f32 0.0, %v439
  %441 = vmatmul.bf16.gmra.mxu0 %v241
  %v442 = vpop.f32.mrf.mxu0
  %v443 = vadd.f32 0.0, %v442
  %v444 = vpop.f32.mrf.mxu0
  %v445 = vadd.f32 0.0, %v444
  %446 = vmatmul.bf16.gmra.mxu0 %v242
  %v447 = vpop.f32.mrf.mxu0
  %v448 = vadd.f32 0.0, %v447
  %v449 = vpop.f32.mrf.mxu0
  %v450 = vadd.f32 0.0, %v449
  %451 = vmatmul.bf16.gmra.mxu0 %v243
  %v452 = vpop.f32.mrf.mxu0
  %v453 = vadd.f32 0.0, %v452
  %v454 = vpop.f32.mrf.mxu0
  %v455 = vadd.f32 0.0, %v454
  %456 = vmatmul.bf16.gmra.mxu0 %v244
  %v457 = vpop.f32.mrf.mxu0
  %v458 = vadd.f32 0.0, %v457
  %v459 = vpop.f32.mrf.mxu0
  %v460 = vadd.f32 0.0, %v459
  %461 = vmatmul.bf16.gmra.mxu0 %v245
  %v462 = vpop.f32.mrf.mxu0
  %v463 = vadd.f32 0.0, %v462
  %v464 = vpop.f32.mrf.mxu0
  %v465 = vadd.f32 0.0, %v464
  %466 = vmatmul.bf16.gmra.mxu0 %v246
  %v467 = vpop.f32.mrf.mxu0
  %v468 = vadd.f32 0.0, %v467
  %v469 = vpop.f32.mrf.mxu0
  %v470 = vadd.f32 0.0, %v469
  %471 = vmatmul.bf16.gmra.mxu0 %v247
  %v472 = vpop.f32.mrf.mxu0
  %v473 = vadd.f32 0.0, %v472
  %v474 = vpop.f32.mrf.mxu0
  %v475 = vadd.f32 0.0, %v474
  %476 = vmatmul.bf16.gmra.mxu0 %v248
  %v477 = vpop.f32.mrf.mxu0
  %v478 = vadd.f32 0.0, %v477
  %v479 = vpop.f32.mrf.mxu0
  %v480 = vadd.f32 0.0, %v479
  %481 = vmatmul.bf16.gmra.mxu0 %v249
  %v482 = vpop.f32.mrf.mxu0
  %v483 = vadd.f32 0.0, %v482
  %v484 = vpop.f32.mrf.mxu0
  %v485 = vadd.f32 0.0, %v484
  %486 = vmatmul.bf16.gmra.mxu0 %v250
  %v487 = vpop.f32.mrf.mxu0
  %v488 = vadd.f32 0.0, %v487
  %v489 = vpop.f32.mrf.mxu0
  %v490 = vadd.f32 0.0, %v489
  %491 = vmatmul.bf16.gmra.mxu0 %v251
  %v492 = vpop.f32.mrf.mxu0
  %v493 = vadd.f32 0.0, %v492
  %v494 = vpop.f32.mrf.mxu0
  %v495 = vadd.f32 0.0, %v494
  %496 = vmatmul.bf16.gmra.mxu0 %v252
  %v497 = vpop.f32.mrf.mxu0
  %v498 = vadd.f32 0.0, %v497
  %v499 = vpop.f32.mrf.mxu0
  %v500 = vadd.f32 0.0, %v499
  %501 = vdwg.mxu0
  %502 = vst [vmem:[%s2] sm:$0xff] %v343
  %503 = vst [vmem:[%s2 + $0x8] sm:$0xff] %v345
  %504 = vst [vmem:[%s2 + $0x10] sm:$0xff] %v348
  %505 = vst [vmem:[%s2 + $0x18] sm:$0xff] %v350
  %506 = vst [vmem:[%s2 + $0x20] sm:$0xff] %v353
  %507 = vst [vmem:[%s2 + $0x28] sm:$0xff] %v355
  %508 = vst [vmem:[%s2 + $0x30] sm:$0xff] %v358
  %509 = vst [vmem:[%s2 + $0x38] sm:$0xff] %v360
  %510 = vst [vmem:[%s2 + $0x40] sm:$0xff] %v363
  %511 = vst [vmem:[%s2 + $0x48] sm:$0xff] %v365
  %512 = vst [vmem:[%s2 + $0x50] sm:$0xff] %v368
  %513 = vst [vmem:[%s2 + $0x58] sm:$0xff] %v370
  %514 = vst [vmem:[%s2 + $0x60] sm:$0xff] %v373
  %515 = vst [vmem:[%s2 + $0x68] sm:$0xff] %v375
  %516 = vst [vmem:[%s2 + $0x70] sm:$0xff] %v378
  %517 = vst [vmem:[%s2 + $0x78] sm:$0xff] %v380
  %518 = vst [vmem:[%s2 + $0x80] sm:$0xff] %v383
  %519 = vst [vmem:[%s2 + $0x88] sm:$0xff] %v385
  %520 = vst [vmem:[%s2 + $0x90] sm:$0xff] %v388
  %521 = vst [vmem:[%s2 + $0x98] sm:$0xff] %v390
  %522 = vst [vmem:[%s2 + $0xa0] sm:$0xff] %v393
  %523 = vst [vmem:[%s2 + $0xa8] sm:$0xff] %v395
  %524 = vst [vmem:[%s2 + $0xb0] sm:$0xff] %v398
  %525 = vst [vmem:[%s2 + $0xb8] sm:$0xff] %v400
  %526 = vst [vmem:[%s2 + $0xc0] sm:$0xff] %v403
  %527 = vst [vmem:[%s2 + $0xc8] sm:$0xff] %v405
  %528 = vst [vmem:[%s2 + $0xd0] sm:$0xff] %v408
  %529 = vst [vmem:[%s2 + $0xd8] sm:$0xff] %v410
  %530 = vst [vmem:[%s2 + $0xe0] sm:$0xff] %v413
  %531 = vst [vmem:[%s2 + $0xe8] sm:$0xff] %v415
  %532 = vst [vmem:[%s2 + $0xf0] sm:$0xff] %v418
  %533 = vst [vmem:[%s2 + $0xf8] sm:$0xff] %v420
  %534 = vst [vmem:[%s2 + $0x100] sm:$0xff] %v423
  %535 = vst [vmem:[%s2 + $0x108] sm:$0xff] %v425
  %536 = vst [vmem:[%s2 + $0x110] sm:$0xff] %v428
  %537 = vst [vmem:[%s2 + $0x118] sm:$0xff] %v430
  %538 = vst [vmem:[%s2 + $0x120] sm:$0xff] %v433
  %539 = vst [vmem:[%s2 + $0x128] sm:$0xff] %v435
  %540 = vst [vmem:[%s2 + $0x130] sm:$0xff] %v438
  %541 = vst [vmem:[%s2 + $0x138] sm:$0xff] %v440
  %542 = vst [vmem:[%s2 + $0x140] sm:$0xff] %v443
  %543 = vst [vmem:[%s2 + $0x148] sm:$0xff] %v445
  %544 = vst [vmem:[%s2 + $0x150] sm:$0xff] %v448
  %545 = vst [vmem:[%s2 + $0x158] sm:$0xff] %v450
  %546 = vst [vmem:[%s2 + $0x160] sm:$0xff] %v453
  %547 = vst [vmem:[%s2 + $0x168] sm:$0xff] %v455
  %548 = vst [vmem:[%s2 + $0x170] sm:$0xff] %v458
  %549 = vst [vmem:[%s2 + $0x178] sm:$0xff] %v460
  %550 = vst [vmem:[%s2 + $0x180] sm:$0xff] %v463
  %551 = vst [vmem:[%s2 + $0x188] sm:$0xff] %v465
  %552 = vst [vmem:[%s2 + $0x190] sm:$0xff] %v468
  %553 = vst [vmem:[%s2 + $0x198] sm:$0xff] %v470
  %554 = vst [vmem:[%s2 + $0x1a0] sm:$0xff] %v473
  %555 = vst [vmem:[%s2 + $0x1a8] sm:$0xff] %v475
  %556 = vst [vmem:[%s2 + $0x1b0] sm:$0xff] %v478
  %557 = vst [vmem:[%s2 + $0x1b8] sm:$0xff] %v480
  %558 = vst [vmem:[%s2 + $0x1c0] sm:$0xff] %v483
  %559 = vst [vmem:[%s2 + $0x1c8] sm:$0xff] %v485
  %560 = vst [vmem:[%s2 + $0x1d0] sm:$0xff] %v488
  %561 = vst [vmem:[%s2 + $0x1d8] sm:$0xff] %v490
  %562 = vst [vmem:[%s2 + $0x1e0] sm:$0xff] %v493
  %563 = vst [vmem:[%s2 + $0x1e8] sm:$0xff] %v495
  %564 = vst [vmem:[%s2 + $0x1f0] sm:$0xff] %v498
  %565 = vst [vmem:[%s2 + $0x1f8] sm:$0xff] %v500
  %v566 = vadd.f32 %v343, %v345
  %v567 = vadd.f32 %v566, %v348
  %v568 = vadd.f32 %v567, %v350
  %v569 = vadd.f32 %v568, %v353
  %v570 = vadd.f32 %v569, %v355
  %v571 = vadd.f32 %v570, %v358
  %v572 = vadd.f32 %v571, %v360
  %v573 = vadd.f32 %v572, %v363
  %v574 = vadd.f32 %v573, %v365
  %v575 = vadd.f32 %v574, %v368
  %v576 = vadd.f32 %v575, %v370
  %v577 = vadd.f32 %v576, %v373
  %v578 = vadd.f32 %v577, %v375
  %v579 = vadd.f32 %v578, %v378
  %v580 = vadd.f32 %v579, %v380
  %v581 = vadd.f32 %v580, %v383
  %v582 = vadd.f32 %v581, %v385
  %v583 = vadd.f32 %v582, %v388
  %v584 = vadd.f32 %v583, %v390
  %v585 = vadd.f32 %v584, %v393
  %v586 = vadd.f32 %v585, %v395
  %v587 = vadd.f32 %v586, %v398
  %v588 = vadd.f32 %v587, %v400
  %v589 = vadd.f32 %v588, %v403
  %v590 = vadd.f32 %v589, %v405
  %v591 = vadd.f32 %v590, %v408
  %v592 = vadd.f32 %v591, %v410
  %v593 = vadd.f32 %v592, %v413
  %v594 = vadd.f32 %v593, %v415
  %v595 = vadd.f32 %v594, %v418
  %v596 = vadd.f32 %v595, %v420
  %v597 = vadd.f32 %v596, %v423
  %v598 = vadd.f32 %v597, %v425
  %v599 = vadd.f32 %v598, %v428
  %v600 = vadd.f32 %v599, %v430
  %v601 = vadd.f32 %v600, %v433
  %v602 = vadd.f32 %v601, %v435
  %v603 = vadd.f32 %v602, %v438
  %v604 = vadd.f32 %v603, %v440
  %v605 = vadd.f32 %v604, %v443
  %v606 = vadd.f32 %v605, %v445
  %v607 = vadd.f32 %v606, %v448
  %v608 = vadd.f32 %v607, %v450
  %v609 = vadd.f32 %v608, %v453
  %v610 = vadd.f32 %v609, %v455
  %v611 = vadd.f32 %v610, %v458
  %v612 = vadd.f32 %v611, %v460
  %v613 = vadd.f32 %v612, %v463
  %v614 = vadd.f32 %v613, %v465
  %v615 = vadd.f32 %v614, %v468
  %v616 = vadd.f32 %v615, %v470
  %v617 = vadd.f32 %v616, %v473
  %v618 = vadd.f32 %v617, %v475
  %v619 = vadd.f32 %v618, %v478
  %v620 = vadd.f32 %v619, %v480
  %v621 = vadd.f32 %v620, %v483
  %v622 = vadd.f32 %v621, %v485
  %v623 = vadd.f32 %v622, %v488
  %v624 = vadd.f32 %v623, %v490
  %v625 = vadd.f32 %v624, %v493
  %v626 = vadd.f32 %v625, %v495
  %v627 = vadd.f32 %v626, %v498
  %v628 = vadd.f32 %v627, %v500
  %v629 = vrot.slane %v628, 4
  %v630 = vadd.f32 %v628, %v629
  %v631 = vrot.slane %v630, 2
  %v632 = vadd.f32 %v630, %v631
  %v633 = vrot.slane %v632, 1
  %v634 = vadd.f32 %v632, %v633
  %v635 = vmul.f32 %v343, %v343
  %v636 = vmul.f32 %v345, %v345
  %v637 = vmul.f32 %v348, %v348
  %v638 = vmul.f32 %v350, %v350
  %v639 = vmul.f32 %v353, %v353
  %v640 = vmul.f32 %v355, %v355
  %v641 = vmul.f32 %v358, %v358
  %v642 = vmul.f32 %v360, %v360
  %v643 = vmul.f32 %v363, %v363
  %v644 = vmul.f32 %v365, %v365
  %v645 = vmul.f32 %v368, %v368
  %v646 = vmul.f32 %v370, %v370
  %v647 = vmul.f32 %v373, %v373
  %v648 = vmul.f32 %v375, %v375
  %v649 = vmul.f32 %v378, %v378
  %v650 = vmul.f32 %v380, %v380
  %v651 = vmul.f32 %v383, %v383
  %v652 = vmul.f32 %v385, %v385
  %v653 = vmul.f32 %v388, %v388
  %v654 = vmul.f32 %v390, %v390
  %v655 = vmul.f32 %v393, %v393
  %v656 = vmul.f32 %v395, %v395
  %v657 = vmul.f32 %v398, %v398
  %v658 = vmul.f32 %v400, %v400
  %v659 = vmul.f32 %v403, %v403
  %v660 = vmul.f32 %v405, %v405
  %v661 = vmul.f32 %v408, %v408
  %v662 = vmul.f32 %v410, %v410
  %v663 = vmul.f32 %v413, %v413
  %v664 = vmul.f32 %v415, %v415
  %v665 = vmul.f32 %v418, %v418
  %v666 = vmul.f32 %v420, %v420
  %v667 = vmul.f32 %v423, %v423
  %v668 = vmul.f32 %v425, %v425
  %v669 = vmul.f32 %v428, %v428
  %v670 = vmul.f32 %v430, %v430
  %v671 = vmul.f32 %v433, %v433
  %v672 = vmul.f32 %v435, %v435
  %v673 = vmul.f32 %v438, %v438
  %v674 = vmul.f32 %v440, %v440
  %v675 = vmul.f32 %v443, %v443
  %v676 = vmul.f32 %v445, %v445
  %v677 = vmul.f32 %v448, %v448
  %v678 = vmul.f32 %v450, %v450
  %v679 = vmul.f32 %v453, %v453
  %v680 = vmul.f32 %v455, %v455
  %v681 = vmul.f32 %v458, %v458
  %v682 = vmul.f32 %v460, %v460
  %v683 = vmul.f32 %v463, %v463
  %v684 = vmul.f32 %v465, %v465
  %v685 = vmul.f32 %v468, %v468
  %v686 = vmul.f32 %v470, %v470
  %v687 = vmul.f32 %v473, %v473
  %v688 = vmul.f32 %v475, %v475
  %v689 = vmul.f32 %v478, %v478
  %v690 = vmul.f32 %v480, %v480
  %v691 = vmul.f32 %v483, %v483
  %v692 = vmul.f32 %v485, %v485
  %v693 = vmul.f32 %v488, %v488
  %v694 = vmul.f32 %v490, %v490
  %v695 = vmul.f32 %v493, %v493
  %v696 = vmul.f32 %v495, %v495
  %v697 = vmul.f32 %v498, %v498
  %v698 = vmul.f32 %v500, %v500
  %v699 = vadd.f32 %v635, %v636
  %v700 = vadd.f32 %v699, %v637
  %v701 = vadd.f32 %v700, %v638
  %v702 = vadd.f32 %v701, %v639
  %v703 = vadd.f32 %v702, %v640
  %v704 = vadd.f32 %v703, %v641
  %v705 = vadd.f32 %v704, %v642
  %v706 = vadd.f32 %v705, %v643
  %v707 = vadd.f32 %v706, %v644
  %v708 = vadd.f32 %v707, %v645
  %v709 = vadd.f32 %v708, %v646
  %v710 = vadd.f32 %v709, %v647
  %v711 = vadd.f32 %v710, %v648
  %v712 = vadd.f32 %v711, %v649
  %v713 = vadd.f32 %v712, %v650
  %v714 = vadd.f32 %v713, %v651
  %v715 = vadd.f32 %v714, %v652
  %v716 = vadd.f32 %v715, %v653
  %v717 = vadd.f32 %v716, %v654
  %v718 = vadd.f32 %v717, %v655
  %v719 = vadd.f32 %v718, %v656
  %v720 = vadd.f32 %v719, %v657
  %v721 = vadd.f32 %v720, %v658
  %v722 = vadd.f32 %v721, %v659
  %v723 = vadd.f32 %v722, %v660
  %v724 = vadd.f32 %v723, %v661
  %v725 = vadd.f32 %v724, %v662
  %v726 = vadd.f32 %v725, %v663
  %v727 = vadd.f32 %v726, %v664
  %v728 = vadd.f32 %v727, %v665
  %v729 = vadd.f32 %v728, %v666
  %v730 = vadd.f32 %v729, %v667
  %v731 = vadd.f32 %v730, %v668
  %v732 = vadd.f32 %v731, %v669
  %v733 = vadd.f32 %v732, %v670
  %v734 = vadd.f32 %v733, %v671
  %v735 = vadd.f32 %v734, %v672
  %v736 = vadd.f32 %v735, %v673
  %v737 = vadd.f32 %v736, %v674
  %v738 = vadd.f32 %v737, %v675
  %v739 = vadd.f32 %v738, %v676
  %v740 = vadd.f32 %v739, %v677
  %v741 = vadd.f32 %v740, %v678
  %v742 = vadd.f32 %v741, %v679
  %v743 = vadd.f32 %v742, %v680
  %v744 = vadd.f32 %v743, %v681
  %v745 = vadd.f32 %v744, %v682
  %v746 = vadd.f32 %v745, %v683
  %v747 = vadd.f32 %v746, %v684
  %v748 = vadd.f32 %v747, %v685
  %v749 = vadd.f32 %v748, %v686
  %v750 = vadd.f32 %v749, %v687
  %v751 = vadd.f32 %v750, %v688
  %v752 = vadd.f32 %v751, %v689
  %v753 = vadd.f32 %v752, %v690
  %v754 = vadd.f32 %v753, %v691
  %v755 = vadd.f32 %v754, %v692
  %v756 = vadd.f32 %v755, %v693
  %v757 = vadd.f32 %v756, %v694
  %v758 = vadd.f32 %v757, %v695
  %v759 = vadd.f32 %v758, %v696
  %v760 = vadd.f32 %v759, %v697
  %v761 = vadd.f32 %v760, %v698
  %v762 = vrot.slane %v761, 4
  %v763 = vadd.f32 %v761, %v762
  %v764 = vrot.slane %v763, 2
  %v765 = vadd.f32 %v763, %v764
  %v766 = vrot.slane %v765, 1
  %v767 = vadd.f32 %v765, %v766
  %v768 = vlaneseq
  %v769 = vshrl.u32 %v768, 7
  %vm770 = vcmp.eq.s32.totalorder %v769, 0
  %vm771 = vcmp.eq.s32.totalorder %v769, 1
  %v772 = vsel %vm771, %v767, 0.0
  %v773 = vsel %vm770, %v634, %v772
  %774 = vst [vmem:[%s3] sm:$0xff] %v773
  // Predicated region
  $region10: #{_conv_bn.2} parent=0 // pred_check
    _
  $region11: #{_conv_bn.2} parent=0 // pred_check_branch
    %776 = sbr.rel (0) target = $region13
  $region12: #{_conv_bn.2} parent=0 // pred_region
    _
  $region13: #{_conv_bn.2} parent=0 // pred_fallthru
    _
  // Predicated region
  $region14: #{_conv_bn.2} parent=0 // pred_check
    _
  $region15: #{_conv_bn.2} parent=0 // pred_check_branch
    %778 = sbr.rel (0) target = $region17
  $region16: #{_conv_bn.2} parent=0 // pred_region
    _
  $region17: #{_conv_bn.2} parent=0 // pred_fallthru
    _
  // Predicated region
  $region18: #{_conv_bn.2} parent=0 // pred_check
    _
  $region19: #{_conv_bn.2} parent=0 // pred_check_branch
    %780 = sbr.rel (0) target = $region21
  $region20: #{_conv_bn.2} parent=0 // pred_region
    _
  $region21: #{_conv_bn.2} parent=0 // pred_fallthru
    _
  // Predicated region
  $region22: #{_conv_bn.2} parent=0 // pred_check
    _
  $region23: #{_conv_bn.2} parent=0 // pred_check_branch
    %782 = sbr.rel (0) target = $region25
  $region24: #{_conv_bn.2} parent=0 // pred_region
    _
  $region25: #{_conv_bn.2} parent=0 // pred_fallthru
    _

</llo_original>
